<compile_context>
chip_gen: v5e
topology: v5e:2x2
jax: 0.10.0
libtpu: 0.0.40
codegen_flags: <defaults>
</compile_context>

<pallas_src>
import jax
import jax.numpy as jnp
from jax.experimental import pallas as pl
from jax.experimental.pallas import tpu as pltpu


def _alias_kernel(m_ref, out_ref):
    # out_ref aliases m_ref (input_output_aliases={0: 0}); forward() is the
    # identity, so there is nothing to compute and nothing to move.
    pass


def _hbm_copy_kernel(m_hbm, out_hbm):
    # Materialize a fresh copy with one HBM->HBM DMA (no VMEM staging, no grid).
    def body(sem):
        cp = pltpu.make_async_copy(m_hbm, out_hbm, sem)
        cp.start()
        cp.wait()

    pl.run_scoped(body, pltpu.SemaphoreType.DMA(()))


def encoder_map_forward(M, *, materialize: bool = False):
    """Pallas implementation of Encoder_map.forward(): returns M.

    materialize=False (default): zero-copy — the output aliases M's buffer.
    materialize=True: the output is a distinct HBM buffer filled by one DMA.
    """
    out_shape = jax.ShapeDtypeStruct(M.shape, M.dtype)
    any_spec = pl.BlockSpec(memory_space=pl.ANY)

    if materialize:
        return pl.pallas_call(
            _hbm_copy_kernel,
            out_shape=out_shape,
            in_specs=[any_spec],
            out_specs=any_spec,
        )(M)

    return pl.pallas_call(
        _alias_kernel,
        out_shape=out_shape,
        in_specs=[any_spec],
        out_specs=any_spec,
        input_output_aliases={0: 0},
    )(M)


def xavier_uniform(key, n_cell: int, n_spot: int, dtype=jnp.float32):
    """Matches torch.nn.init.xavier_uniform_ for a (n_cell, n_spot) weight.

    fan_in = n_spot, fan_out = n_cell, gain = 1.0.
    """
    bound = (6.0 / (n_cell + n_spot)) ** 0.5
    return jax.random.uniform(
        key, (n_cell, n_spot), dtype=dtype, minval=-bound, maxval=bound
    )


if __name__ == "__main__":
    key = jax.random.PRNGKey(0)
    k_small, k_big = jax.random.split(key)

    # Small shape consistent with the module (n_cell, n_spot).
    n_cell, n_spot = 16, 32
    M_small = xavier_uniform(k_small, n_cell, n_spot)

    # Default zero-copy (aliased) passthrough.
    out_small = jax.block_until_ready(encoder_map_forward(M_small))
    assert out_small.shape == (n_cell, n_spot)
    assert out_small.dtype == M_small.dtype
    assert jnp.array_equal(out_small, M_small)

    # Materialized-copy path: a single HBM->HBM DMA producing a fresh buffer.
    M_big = xavier_uniform(k_big, 300, 640)
    out_big = jax.block_until_ready(encoder_map_forward(M_big, materialize=True))
    assert out_big.shape == (300, 640)
    assert jnp.array_equal(out_big, M_big)

    print("KERNEL_OK")
</pallas_src>

<mosaic_0001>
module attributes {stable_mosaic.version = 11 : i64} {
  func.func @_alias_kernel(%arg0: memref<16x32xf32, #tpu.memory_space<any>>, %arg1: memref<16x32xf32, #tpu.memory_space<any>>) attributes {dimension_semantics = [], scalar_prefetch = 0 : i64, scratch_operands = 0 : i64, tpu.core_type = #tpu.core_type<tc>} {
    return
  }
}

</mosaic_0001>

<llo_original>
// kernel: tpu_custom_call.1
$region0: #{tpu_custom_call.1}
  #allocation0 [shape = 'u32[]', space=smem, size = 0x4, offset = 0x4, fixed_abs, tag = 'smem constant byte address 0x4 - core index']
  #allocation1 [shape = 'u32[72,128]{1,0:T(1,128)}', space=vmem, size = 0x9000, scoped, tag = 'internal scratch']
  %s0 = inlined_call_operand.hbm [shape: f32[16,32], index: 0, kind: input, shape index: {}, may-alias: {0,1}]
  %s1 = inlined_call_operand.hbm [shape: f32[16,32], index: 1, kind: output, shape index: {}, may-alias: {0,1}]
  %s2 = sld [smem:[#allocation0]]
  $region2: #{tpu_custom_call.1} parent=0
    _
  %s4 = ssub.s32 1, %s2
  %s5 = scalar_select 0, %s4, %s2

</llo_original>
